<compile_context>
chip_gen: v7x
topology: tpu7x:2x2x1
jax: 0.10.0
libtpu: 0.0.40
codegen_flags: <defaults>
</compile_context>

<pallas_src>
import functools

import jax
import jax.numpy as jnp
from jax import lax
from jax.experimental import pallas as pl
from jax.experimental.pallas import tpu as pltpu


def _vmem_budget_bytes():
    """Generation-aware scoped-VMEM budget."""
    try:
        cap = pltpu.get_tpu_info().vmem_capacity_bytes
    except Exception:
        cap = 64 * 1024 * 1024                      # conservative (v7x-sized)
    if cap >= 96 * 1024 * 1024:                     # v5e / v6e: 128 MiB physical
        return 96 * 1024 * 1024
    return 40 * 1024 * 1024                         # v7x: 64 MiB physical


# ---------------------------------------------------------------------------
# single-pass fused kernel: whole (1, C, S) batch slab resident in VMEM
# ---------------------------------------------------------------------------
def _resse_fused_kernel(x_ref, w1t_ref, w2t_ref, o_ref, *, inv_hw):
    """x_ref/o_ref: (1, C, S); w1t_ref: (C, Cr); w2t_ref: (Cr, C)."""
    x = x_ref[...]
    # Channel means, accumulated in f32.
    y = jnp.sum(x, axis=2, dtype=jnp.float32) * inv_hw            # (1, C)
    h = jnp.maximum(
        jnp.dot(y, w1t_ref[...],
                preferred_element_type=jnp.float32,
                precision=lax.Precision.HIGHEST), 0.0)             # (1, Cr)
    s = jax.nn.sigmoid(
        jnp.dot(h, w2t_ref[...],
                preferred_element_type=jnp.float32,
                precision=lax.Precision.HIGHEST))                  # (1, C)
    g = (1.0 + s)[:, :, None].astype(o_ref.dtype)                  # fused residual
    o_ref[...] = x * g


# ---------------------------------------------------------------------------
# two-pass tiled fallback (very large slabs only)
# ---------------------------------------------------------------------------
def _squeeze_excite_kernel(x_ref, w1t_ref, w2t_ref, gate_ref, *, inv_hw):
    """Pass 1: accumulate per-channel sums over spatial tiles; finalize gate.

    x_ref: (1, C, TS); w1t_ref: (C, Cr); w2t_ref: (Cr, C); gate_ref: (1, C, 1) f32.
    """
    t = pl.program_id(1)

    @pl.when(t == 0)
    def _init():
        gate_ref[...] = jnp.zeros_like(gate_ref)

    xs = x_ref[...].astype(jnp.float32)                            # (1, C, TS)
    gate_ref[...] += jnp.sum(xs, axis=2, keepdims=True)            # (1, C, 1)

    @pl.when(t == pl.num_programs(1) - 1)
    def _finalize():
        y = gate_ref[...][:, :, 0] * inv_hw                        # (1, C) means
        h = jnp.maximum(
            jnp.dot(y, w1t_ref[...],
                    preferred_element_type=jnp.float32,
                    precision=lax.Precision.HIGHEST), 0.0)
        s = jax.nn.sigmoid(
            jnp.dot(h, w2t_ref[...],
                    preferred_element_type=jnp.float32,
                    precision=lax.Precision.HIGHEST))
        gate_ref[...] = (1.0 + s)[:, :, None]                      # fused residual


def _apply_kernel(x_ref, gate_ref, o_ref):
    """Pass 2: out = x * gate, in the input dtype (residual already fused)."""
    o_ref[...] = x_ref[...] * gate_ref[...].astype(o_ref.dtype)


def _pick_spatial_tile(s_pad, c, itemsize, max_block_bytes):
    """Largest multiple of 128 that divides s_pad with one (1, C, TS) block
    under max_block_bytes.  s_pad is always a multiple of 128."""
    budget_ts = max(128, (max_block_bytes // max(1, c * itemsize)) // 128 * 128)
    ts = min(budget_ts, s_pad)
    while s_pad % ts != 0:
        ts -= 128
    return ts


# ---------------------------------------------------------------------------
# wrapper
# ---------------------------------------------------------------------------
def resse_pallas(x_nchw, w1, w2, *, donate_x=False):
    """ResSE forward: x * (1 + sigmoid(relu(mean_HW(x) @ W1.T) @ W2.T)).

    x_nchw: (B, C, H, W);  w1: (C//r, C);  w2: (C, C//r).
    donate_x: alias the output onto x's buffer (only if the caller is done with x).
    """
    B, C, H, W = x_nchw.shape
    S = H * W
    Cr = w1.shape[0]
    dtype = x_nchw.dtype
    itemsize = jnp.dtype(dtype).itemsize
    inv_hw = 1.0 / float(S)

    x_flat = x_nchw.reshape(B, C, S)

    # Pre-cast / pre-transpose the tiny weights once at trace time (free).
    w1_t = w1.astype(jnp.float32).T                                # (C, Cr)
    w2_t = w2.astype(jnp.float32).T                                # (Cr, C)
    weight_bytes = 2 * (w1_t.size + w2_t.size) * 4                 # double-buffered

    scoped_vmem = _vmem_budget_bytes()

    # ---- single-pass fast path: one resident (1, C, S) slab per batch ----
    slab_bytes = C * S * itemsize
    fused_vmem = (4 * slab_bytes          # 2x in + 2x out double buffers
                  + C * S * 4             # f32 temp for the channel reduce
                  + weight_bytes
                  + (2 << 20))            # compiler-internal headroom
    if fused_vmem <= scoped_vmem:
        out_flat = pl.pallas_call(
            functools.partial(_resse_fused_kernel, inv_hw=inv_hw),
            out_shape=jax.ShapeDtypeStruct((B, C, S), dtype),
            grid_spec=pltpu.PrefetchScalarGridSpec(
                num_scalar_prefetch=0,
                grid=(B,),
                in_specs=[
                    pl.BlockSpec((1, C, S), lambda b: (b, 0, 0)),
                    pl.BlockSpec((C, Cr), lambda b: (0, 0)),
                    pl.BlockSpec((Cr, C), lambda b: (0, 0)),
                ],
                out_specs=pl.BlockSpec((1, C, S), lambda b: (b, 0, 0)),
            ),
            compiler_params=pltpu.CompilerParams(
                dimension_semantics=("parallel",),
                vmem_limit_bytes=scoped_vmem),
            input_output_aliases=({0: 0} if donate_x else {}),
        )(x_flat, w1_t, w2_t)
        return out_flat.reshape(B, C, H, W)

    # ---- two-pass tiled fallback (slab too big for VMEM residency) ----
    # Zero-pad S to a multiple of 128: pad is sum-neutral (inv_hw uses true S),
    # keeps per-step VMEM bounded at any resolution, costs < 128/S extra traffic.
    S_pad = ((S + 127) // 128) * 128
    x_padded = x_flat
    if S_pad != S:
        x_padded = jnp.pad(x_flat, ((0, 0), (0, 0), (0, S_pad - S)))

    max_block_bytes = 4 * 1024 * 1024
    ts = _pick_spatial_tile(S_pad, C, itemsize, max_block_bytes)
    n_t = S_pad // ts

    # pass 1: per-batch channel gate  g = 1 + sigmoid(relu(mean @ W1t) @ W2t)
    gate = pl.pallas_call(
        functools.partial(_squeeze_excite_kernel, inv_hw=inv_hw),
        out_shape=jax.ShapeDtypeStruct((B, C, 1), jnp.float32),
        grid_spec=pltpu.PrefetchScalarGridSpec(
            num_scalar_prefetch=0,
            grid=(B, n_t),
            in_specs=[
                pl.BlockSpec((1, C, ts), lambda b, t: (b, 0, t)),
                pl.BlockSpec((C, Cr), lambda b, t: (0, 0)),
                pl.BlockSpec((Cr, C), lambda b, t: (0, 0)),
            ],
            out_specs=pl.BlockSpec((1, C, 1), lambda b, t: (b, 0, 0)),
        ),
        compiler_params=pltpu.CompilerParams(
            dimension_semantics=("parallel", "arbitrary"),
            vmem_limit_bytes=scoped_vmem),
    )(x_padded, w1_t, w2_t)

    # pass 2: out = x * g, native dtype, both grid axes parallel
    out_padded = pl.pallas_call(
        _apply_kernel,
        out_shape=jax.ShapeDtypeStruct((B, C, S_pad), dtype),
        grid_spec=pltpu.PrefetchScalarGridSpec(
            num_scalar_prefetch=0,
            grid=(B, n_t),
            in_specs=[
                pl.BlockSpec((1, C, ts), lambda b, t: (b, 0, t)),
                pl.BlockSpec((1, C, 1), lambda b, t: (b, 0, 0)),
            ],
            out_specs=pl.BlockSpec((1, C, ts), lambda b, t: (b, 0, t)),
        ),
        compiler_params=pltpu.CompilerParams(
            dimension_semantics=("parallel", "parallel"),
            vmem_limit_bytes=scoped_vmem),
        input_output_aliases=({0: 0} if (donate_x and S_pad == S) else {}),
    )(x_padded, gate)

    return out_padded[:, :, :S].reshape(B, C, H, W)


def resse_reference(x_nchw, w1, w2):
    xf = x_nchw.astype(jnp.float32)
    y = jnp.mean(xf, axis=(2, 3))                                  # (B, C)
    h = jnp.maximum(
        jnp.dot(y, w1.astype(jnp.float32).T,
                precision=lax.Precision.HIGHEST), 0.0)
    s = jax.nn.sigmoid(
        jnp.dot(h, w2.astype(jnp.float32).T,
                precision=lax.Precision.HIGHEST))
    return (xf * (1.0 + s)[:, :, None, None]).astype(x_nchw.dtype)


if __name__ == "__main__":
    # small shapes consistent with the module
    B, C, H, W = 2, 4, 16, 16
    reduction = 2
    Cr = C // reduction

    key = jax.random.PRNGKey(0)
    kx, k1, k2 = jax.random.split(key, 3)

    x = jax.random.normal(kx, (B, C, H, W), dtype=jnp.float32)
    # nn.Linear(ch_in, ch_in//r, bias=False) weight: (Cr, C); second Linear: (C, Cr)
    w1 = jax.random.normal(k1, (Cr, C), dtype=jnp.float32) * 0.5
    w2 = jax.random.normal(k2, (C, Cr), dtype=jnp.float32) * 0.5

    out = resse_pallas(x, w1, w2)
    out = jax.block_until_ready(out)

    ref = resse_reference(x, w1, w2)
    assert out.shape == (B, C, H, W)
    assert jnp.allclose(out, ref, atol=1e-5, rtol=1e-5), float(
        jnp.max(jnp.abs(out - ref)))

    print("KERNEL_OK")
</pallas_src>

<mosaic_0001>
module attributes {stable_mosaic.version = 11 : i64} {
  func.func @_resse_fused_kernel(%arg0: i32, %arg1: memref<1x4x256xf32, #tpu.memory_space<vmem>>, %arg2: memref<4x2xf32, #tpu.memory_space<vmem>>, %arg3: memref<2x4xf32, #tpu.memory_space<vmem>>, %arg4: memref<1x4x256xf32, #tpu.memory_space<vmem>>) attributes {dimension_semantics = [#tpu.dimension_semantics<parallel>], iteration_bounds = array<i64: 2>, scalar_prefetch = 0 : i64, scratch_operands = 0 : i64, tpu.core_type = #tpu.core_type<tc>, window_params = [{transform_indices = @transform_0, window_bounds = array<i64: 1, 4, 256>}, {pipeline_mode = #tpu.pipeline_mode<synchronous>, transform_indices = @transform_1, window_bounds = array<i64: 4, 2>}, {pipeline_mode = #tpu.pipeline_mode<synchronous>, transform_indices = @transform_2, window_bounds = array<i64: 2, 4>}, {transform_indices = @transform_3, window_bounds = array<i64: 1, 4, 256>}]} {
    %c0 = arith.constant 0 : index
    %c0_0 = arith.constant 0 : index
    %c0_1 = arith.constant 0 : index
    %0 = vector.load %arg1[%c0, %c0_0, %c0_1] : memref<1x4x256xf32, #tpu.memory_space<vmem>>, vector<1x4x256xf32>
    %cst = arith.constant dense<0.000000e+00> : vector<1x4xf32>
    %1 = vector.multi_reduction <add>, %0, %cst [2] : vector<1x4x256xf32> to vector<1x4xf32>
    %cst_2 = arith.constant 3.906250e-03 : f32
    %2 = vector.broadcast %cst_2 : f32 to vector<1x4xf32>
    %3 = arith.mulf %1, %2 : vector<1x4xf32>
    %c0_3 = arith.constant 0 : index
    %c0_4 = arith.constant 0 : index
    %4 = vector.load %arg2[%c0_3, %c0_4] : memref<4x2xf32, #tpu.memory_space<vmem>>, vector<4x2xf32>
    %cst_5 = arith.constant dense<0.000000e+00> : vector<1x2xf32>
    %5 = tpu.matmul %3, %4, %cst_5 {dimension_numbers = #tpu.dot_dimension_numbers<[1], [0], [0], [1], [0, 0, 1, 1], [], []>, precision = #tpu.contract_precision<fp32>} : vector<1x4xf32>, vector<4x2xf32>, vector<1x2xf32> -> vector<1x2xf32>
    %cst_6 = arith.constant 0.000000e+00 : f32
    %6 = vector.broadcast %cst_6 : f32 to vector<1x2xf32>
    %7 = arith.maximumf %5, %6 : vector<1x2xf32>
    %c0_7 = arith.constant 0 : index
    %c0_8 = arith.constant 0 : index
    %8 = vector.load %arg3[%c0_7, %c0_8] : memref<2x4xf32, #tpu.memory_space<vmem>>, vector<2x4xf32>
    %cst_9 = arith.constant dense<0.000000e+00> : vector<1x4xf32>
    %9 = tpu.matmul %7, %8, %cst_9 {dimension_numbers = #tpu.dot_dimension_numbers<[1], [0], [0], [1], [0, 0, 1, 1], [], []>, precision = #tpu.contract_precision<fp32>} : vector<1x2xf32>, vector<2x4xf32>, vector<1x4xf32> -> vector<1x4xf32>
    %10 = arith.negf %9 : vector<1x4xf32>
    %11 = math.exp %10 : vector<1x4xf32>
    %cst_10 = arith.constant 1.000000e+00 : f32
    %12 = vector.broadcast %cst_10 : f32 to vector<1x4xf32>
    %13 = arith.addf %12, %11 : vector<1x4xf32>
    %14 = arith.divf %12, %13 : vector<1x4xf32>
    %cst_11 = arith.constant 1.000000e+00 : f32
    %15 = vector.broadcast %cst_11 : f32 to vector<1x4xf32>
    %16 = arith.addf %15, %14 : vector<1x4xf32>
    %17 = vector.shape_cast %16 : vector<1x4xf32> to vector<1x4x1xf32>
    %18 = vector.broadcast %17 : vector<1x4x1xf32> to vector<1x4x256xf32>
    %19 = arith.mulf %0, %18 : vector<1x4x256xf32>
    %c0_12 = arith.constant 0 : index
    %c0_13 = arith.constant 0 : index
    %c0_14 = arith.constant 0 : index
    %20 = vector.load %arg4[%c0_12, %c0_13, %c0_14] : memref<1x4x256xf32, #tpu.memory_space<vmem>>, vector<1x4x256xf32>
    tpu.vector_store %arg4[%c0_12, %c0_13, %c0_14], %19 {strides = array<i32>} : memref<1x4x256xf32, #tpu.memory_space<vmem>>, vector<1x4x256xf32>,
    return
  }
  func.func @transform_0(%arg0: i32) -> (i32, i32, i32) {
    %c0_i32 = arith.constant 0 : i32
    %c0_i32_0 = arith.constant 0 : i32
    %c0_i32_1 = arith.constant 0 : i32
    return %arg0, %c0_i32, %c0_i32_0 : i32, i32, i32
  }
  func.func @transform_1(%arg0: i32) -> (i32, i32) {
    %c0_i32 = arith.constant 0 : i32
    %c0_i32_0 = arith.constant 0 : i32
    %c0_i32_1 = arith.constant 0 : i32
    return %c0_i32, %c0_i32_0 : i32, i32
  }
  func.func @transform_2(%arg0: i32) -> (i32, i32) {
    %c0_i32 = arith.constant 0 : i32
    %c0_i32_0 = arith.constant 0 : i32
    %c0_i32_1 = arith.constant 0 : i32
    return %c0_i32, %c0_i32_0 : i32, i32
  }
  func.func @transform_3(%arg0: i32) -> (i32, i32, i32) {
    %c0_i32 = arith.constant 0 : i32
    %c0_i32_0 = arith.constant 0 : i32
    %c0_i32_1 = arith.constant 0 : i32
    return %arg0, %c0_i32, %c0_i32_0 : i32, i32, i32
  }
}

</mosaic_0001>

<llo_original>
// kernel: tpu_custom_call.1
$region0: #{tpu_custom_call.1}
  #allocation0 [shape = 'u32[]', space=smem, size = 0x4, offset = 0x4, fixed_abs, tag = 'smem constant byte address 0x4 - core index']
  #allocation1 [shape = 'u32[144,128]{1,0:T(1,128)}', space=vmem, size = 0x12000, scoped, tag = 'internal scratch']
  %s0 = inlined_call_operand.hbm [shape: f32[2,4,256], index: 0, kind: input, shape index: {}]
  %s1 = inlined_call_operand.vmem [shape: f32[4,2], index: 1, kind: input, shape index: {}]
  %s2 = inlined_call_operand.vmem [shape: f32[2,4], index: 2, kind: input, shape index: {}]
  %s3 = inlined_call_operand.hbm [shape: f32[2,4,256], index: 3, kind: output, shape index: {}]
  %s4 = sld [smem:[#allocation0]]
  $region49: #{tpu_custom_call.1} parent=0
    _
  %s6 = ssub.s32 1, %s4
  %s7 = scalar_select 0, %s6, %s4
  $region1: #{tpu_custom_call.1} parent=0
    #allocation2 [shape = 'u8[8192]{0}', space=vmem, size = 0x2000, scoped, tag = 'input window, operand 0']
    #allocation3 [shape = 's32[2]{0}', space=sflag, size = 0x8, scoped, tag = 'scoped memory for tpu_custom_call.1']
    #allocation4 [shape = 's32[2]{0}', space=sflag, size = 0x8, scoped, tag = 'scoped memory for tpu_custom_call.1']
    #allocation5 [shape = 'u8[8192]{0}', space=vmem, size = 0x2000, scoped, tag = 'output window, operand 0']
    %8 = vsyncpa [#allocation3], 0
    %s9 = scalar_lea.sflag [#allocation3], 1
    %10 = vsyncpa %s9, 0
    %11 = vsyncpa [#allocation4], 0
    %s12 = scalar_lea.sflag [#allocation4], 1
    %13 = vsyncpa %s12, 0
    loop: start=0, step=1, limit=4
    $region2: #{tpu_custom_call.1} parent=1 // loop_pre_header
      _
    $region3: #{tpu_custom_call.1} parent=1 // loop_header
      %s15 = sphi 0, %s19
      %p16 = scmp.ge.s32.totalorder %s15, 4
      %s25 = sphi 0, %s27
      %s28 = sphi 0, %s25
      %s29 = sphi 0, %s28
      %s45 = sphi 0, %s29
      %s49 = sphi 0, %s49
      %s51 = sphi 0, %s49
      %s52 = sphi 0, %s51
      %s66 = sphi 0, %s52
      %s70 = sphi 0, %s70
      %s72 = sphi 0, %s70
      %s73 = sphi 0, %s72
      %s87 = sphi 0, %s73
      %s93 = sphi 0, %s95
      %s96 = sphi 0, %s93
      %s97 = sphi 0, %s96
      %s113 = sphi 0, %s97
    $region4: #{tpu_custom_call.1} parent=1 // loop_header_branch
      %18 = sbr.rel (%p16) target = $region8
    $region5: #{tpu_custom_call.1} parent=1 // loop_body
      %s20 = ssub.s32 %s15, 1
      %s21 = ssub.s32 %s15, 2
      %s22 = sadd.s32 %s15, 1
      %s23 = ssub.s32 %s15, %s22
      %p24 = scmp.eq.s32.totalorder %s23, 0
      %s26 = sadd.s32 %s25, 1
      %s27 = scalar_select %p24, %s25, %s26
      %p30 = pneg %p24
      %p31 = scmp.eq.s32.totalorder %s15, 1
      %p32 = por %p30, %p31
      %p33 = scmp.ne.s32.totalorder %s25, %s28
      %p34 = scmp.eq.s32.totalorder %s15, 0
      %p35 = por %p33, %p34
      %p36 = scmp.ne.s32.totalorder %s25, %s28
      %p37 = scmp.eq.s32.totalorder %s20, 1
      %p38 = por %p36, %p37
      %p39 = scmp.ne.s32.totalorder %s28, %s29
      %p40 = scmp.eq.s32.totalorder %s20, 0
      %p41 = por %p39, %p40
      %p42 = scmp.ne.s32.totalorder %s28, %s29
      %p43 = scmp.eq.s32.totalorder %s21, 1
      %p44 = por %p42, %p43
      %p46 = scmp.ne.s32.totalorder %s29, %s45
      %p47 = scmp.eq.s32.totalorder %s21, 0
      %p48 = por %p46, %p47
      %s50 = sadd.s32 %s49, 1
      %p53 = scmp.eq.s32.totalorder %s15, 1
      %p54 = scmp.ne.s32.totalorder %s49, %s51
      %p55 = scmp.eq.s32.totalorder %s15, 0
      %p56 = por %p54, %p55
      %p57 = scmp.ne.s32.totalorder %s49, %s51
      %p58 = scmp.eq.s32.totalorder %s20, 1
      %p59 = por %p57, %p58
      %p60 = scmp.ne.s32.totalorder %s51, %s52
      %p61 = scmp.eq.s32.totalorder %s20, 0
      %p62 = por %p60, %p61
      %p63 = scmp.ne.s32.totalorder %s51, %s52
      %p64 = scmp.eq.s32.totalorder %s21, 1
      %p65 = por %p63, %p64
      %p67 = scmp.ne.s32.totalorder %s52, %s66
      %p68 = scmp.eq.s32.totalorder %s21, 0
      %p69 = por %p67, %p68
      %s71 = sadd.s32 %s70, 1
      %p74 = scmp.eq.s32.totalorder %s15, 1
      %p75 = scmp.ne.s32.totalorder %s70, %s72
      %p76 = scmp.eq.s32.totalorder %s15, 0
      %p77 = por %p75, %p76
      %p78 = scmp.ne.s32.totalorder %s70, %s72
      %p79 = scmp.eq.s32.totalorder %s20, 1
      %p80 = por %p78, %p79
      %p81 = scmp.ne.s32.totalorder %s72, %s73
      %p82 = scmp.eq.s32.totalorder %s20, 0
      %p83 = por %p81, %p82
      %p84 = scmp.ne.s32.totalorder %s72, %s73
      %p85 = scmp.eq.s32.totalorder %s21, 1
      %p86 = por %p84, %p85
      %p88 = scmp.ne.s32.totalorder %s73, %s87
      %p89 = scmp.eq.s32.totalorder %s21, 0
      %p90 = por %p88, %p89
      %s91 = ssub.s32 %s15, %s22
      %p92 = scmp.eq.s32.totalorder %s91, 0
      %s94 = sadd.s32 %s93, 1
      %s95 = scalar_select %p92, %s93, %s94
      %p98 = pneg %p92
      %p99 = scmp.eq.s32.totalorder %s15, 1
      %p100 = por %p98, %p99
      %p101 = scmp.ne.s32.totalorder %s93, %s96
      %p102 = scmp.eq.s32.totalorder %s15, 0
      %p103 = por %p101, %p102
      %p104 = scmp.ne.s32.totalorder %s93, %s96
      %p105 = scmp.eq.s32.totalorder %s20, 1
      %p106 = por %p104, %p105
      %p107 = scmp.ne.s32.totalorder %s96, %s97
      %p108 = scmp.eq.s32.totalorder %s20, 0
      %p109 = por %p107, %p108
      %p110 = scmp.ne.s32.totalorder %s96, %s97
      %p111 = scmp.eq.s32.totalorder %s21, 1
      %p112 = por %p110, %p111
      %p114 = scmp.ne.s32.totalorder %s97, %s113
      %p115 = scmp.eq.s32.totalorder %s21, 0
      %p116 = por %p114, %p115
      %p117 = scmp.le.s32.totalorder 1, %s15
      %p118 = scmp.lt.s32.totalorder %s15, 3
      %p119 = pnand %p117, %p118
      %p120 = pneg %p119
      // Predicated region
      $region9: #{tpu_custom_call.1} parent=5 // pred_check
        _
      $region10: #{tpu_custom_call.1} parent=5 // pred_check_branch
        %122 = sbr.rel (%p119) target = $region12
      $region11: #{tpu_custom_call.1} parent=5 // pred_region
        %s123 = ssub.s32 %s15, 1
        // Predicated region
        $region13: #{tpu_custom_call.1} parent=11 // pred_check
          %p124 = pneg %p62
        $region14: #{tpu_custom_call.1} parent=11 // pred_check_branch
          %126 = sbr.rel (%p124) target = $region16
        $region15: #{tpu_custom_call.1} parent=11 // pred_region
          _
        $region16: #{tpu_custom_call.1} parent=11 // pred_fallthru
          _
        // Predicated region
        $region17: #{tpu_custom_call.1} parent=11 // pred_check
          %p127 = pneg %p83
        $region18: #{tpu_custom_call.1} parent=11 // pred_check_branch
          %129 = sbr.rel (%p127) target = $region20
        $region19: #{tpu_custom_call.1} parent=11 // pred_region
          _
        $region20: #{tpu_custom_call.1} parent=11 // pred_fallthru
          _
      $region12: #{tpu_custom_call.1} parent=5 // pred_fallthru
        _
      %p130 = scmp.lt.s32.totalorder %s15, 2
      // Predicated region
      $region21: #{tpu_custom_call.1} parent=5 // pred_check
        %p131 = pneg %p130
      $region22: #{tpu_custom_call.1} parent=5 // pred_check_branch
        %133 = sbr.rel (%p131) target = $region24
      $region23: #{tpu_custom_call.1} parent=5 // pred_region
        // Predicated region
        $region25: #{tpu_custom_call.1} parent=23 // pred_check
          %p134 = pneg %p35
        $region26: #{tpu_custom_call.1} parent=23 // pred_check_branch
          %136 = sbr.rel (%p134) target = $region28
        $region27: #{tpu_custom_call.1} parent=23 // pred_region
          %s137 = sand.u32 %s25, 1
          %s138 = scalar_lea.sflag [#allocation3], %s137
          %s139 = sand.u32 %s25, 1
          %s140 = smul.addr %s139, 8
          %s141 = scalar_lea.vmem [#allocation2], %s140
          %s143 = ssub.s32 128, 128
          %144 = vsyncadd %s138, %s143
          %s145 = smul.addr %s15, 2
          %s146 = smul.addr %s145, 64
          %s147 = scalar_lea.hbm %s0, %s146
          %s149 = sshll.u32 %s141, 4
          %s150 = int_to_ptr.vmem [resolvable:$true] %s149
          %152 = dma.hbm_to_vmem [thread:$0]  %s147, 128, %s150, %s138
        $region28: #{tpu_custom_call.1} parent=23 // pred_fallthru
          _
      $region24: #{tpu_custom_call.1} parent=5 // pred_fallthru
        _
      %p153 = scmp.le.s32.totalorder 1, %s15
      %p154 = scmp.lt.s32.totalorder %s15, 3
      %p155 = pnand %p153, %p154
      %p156 = pneg %p155
      // Predicated region
      $region29: #{tpu_custom_call.1} parent=5 // pred_check
        _
      $region30: #{tpu_custom_call.1} parent=5 // pred_check_branch
        %158 = sbr.rel (%p155) target = $region32
      $region31: #{tpu_custom_call.1} parent=5 // pred_region
        %s159 = ssub.s32 %s15, 1
        %s160 = sand.u32 %s28, 1
        %s161 = scalar_lea.sflag [#allocation3], %s160
        %s162 = sand.u32 %s28, 1
        %s163 = smul.addr %s162, 8
        %s164 = scalar_lea.vmem [#allocation2], %s163
        // Predicated region
        $region33: #{tpu_custom_call.1} parent=31 // pred_check
          %p165 = pneg %p41
        $region34: #{tpu_custom_call.1} parent=31 // pred_check_branch
          %167 = sbr.rel (%p165) target = $region36
        $region35: #{tpu_custom_call.1} parent=31 // pred_region
          %168 = dma.done %s161, 128
        $region36: #{tpu_custom_call.1} parent=31 // pred_fallthru
          _
        %s169 = sand.u32 %s28, 1
        %s170 = scalar_lea.sflag [#allocation3], %s169
        %s171 = sand.u32 %s28, 1
        %s172 = smul.addr %s171, 8
        %s173 = scalar_lea.vmem [#allocation2], %s172
        %p174 = pneg %p41
        %p175 = pneg %p38
        %p176 = pneg %p62
        %p177 = pneg %p59
        %p178 = pneg %p83
        %p179 = pneg %p80
        %p180 = pneg %p109
        %p181 = pneg %p106
        %s182 = sand.u32 %s96, 1
        %s183 = scalar_lea.sflag [#allocation4], %s182
        %s184 = sand.u32 %s96, 1
        %s185 = smul.addr %s184, 8
        %s186 = scalar_lea.vmem [#allocation5], %s185
        %v187 = vld [vmem:[%s164] sm:$0xff]
        %v189 = vcombine.high %v187, %v187
        %vm191 = vcmask 1043456
        %v192 = vsel %vm191, %v187, 0.0
        %v193 = vsel %vm191, %v189, 0.0
        %v194 = vadd.f32 %v192, %v193
        %195 = vadd.xlane.f32.xlu0 %v194
        %v196 = vpop.xlane.xlu0 %195
        %v197 = vmul.f32 %v196, 0.00390625
        %v198 = vld [vmem:[%s1] sm:$0xf]
        %v200 = vlaneseq
        %v201 = vand.u32 %v200, 127
        %v202 = vlaneseq
        %v203 = vshrl.u32 %v202, 7
        %v204 = vsub.s32 %v201, %v203
        %v205 = vrot.slane %v197, %v204
        %vm206 = vcmask 31744
        %v207 = vsel %vm206, %v205, 0
        %v210 = vsel %vm191, %v198, 0
        %212 = vmatprep.subr.mxu0 0.0
        %v213 = vand.u32 %v210, 4294901760
        %214 = vmatpush1.msra.mxu0 %v213
        %215 = vmatprep.subr.mxu0 0.0
        %216 = vmatpush1.msra.mxu0 0.0
        %217 = vmatprep.subr.mxu0 0.0
        %218 = vmatpush1.msra.mxu0 0.0
        %219 = vmatprep.subr.mxu0 0.0
        %220 = vmatpush1.msra.mxu0 0.0
        %221 = vmatprep.subr.mxu0 0.0
        %222 = vmatpush1.msra.mxu0 0.0
        %223 = vmatprep.subr.mxu0 0.0
        %224 = vmatpush1.msra.mxu0 0.0
        %225 = vmatprep.subr.mxu0 0.0
        %226 = vmatpush1.msra.mxu0 0.0
        %227 = vmatprep.subr.mxu0 0.0
        %228 = vmatpush1.msra.mxu0 0.0
        %229 = vmatprep.subr.mxu0 0.0
        %230 = vmatpush1.msra.mxu0 0.0
        %231 = vmatprep.subr.mxu0 0.0
        %232 = vmatpush1.msra.mxu0 0.0
        %233 = vmatprep.subr.mxu0 0.0
        %234 = vmatpush1.msra.mxu0 0.0
        %235 = vmatprep.subr.mxu0 0.0
        %236 = vmatpush1.msra.mxu0 0.0
        %237 = vmatprep.subr.mxu0 0.0
        %238 = vmatpush1.msra.mxu0 0.0
        %239 = vmatprep.subr.mxu0 0.0
        %240 = vmatpush1.msra.mxu0 0.0
        %241 = vmatprep.subr.mxu0 0.0
        %242 = vmatpush1.msra.mxu0 0.0
        %243 = vmatprep.subr.mxu0 0.0
        %244 = vmatpush1.msra.mxu0 0.0
        %245 = vmatprep.subr.mxu0 0.0
        %246 = vmatpush1.msra.mxu0 0.0
        %247 = vmatprep.subr.mxu0 0.0
        %248 = vmatpush1.msra.mxu0 0.0
        %249 = vmatprep.subr.mxu0 0.0
        %250 = vmatpush1.msra.mxu0 0.0
        %251 = vmatprep.subr.mxu0 0.0
        %252 = vmatpush1.msra.mxu0 0.0
        %253 = vmatprep.subr.mxu0 0.0
        %254 = vmatpush1.msra.mxu0 0.0
        %255 = vmatprep.subr.mxu0 0.0
        %256 = vmatpush1.msra.mxu0 0.0
        %257 = vmatprep.subr.mxu0 0.0
        %258 = vmatpush1.msra.mxu0 0.0
        %259 = vmatprep.subr.mxu0 0.0
        %260 = vmatpush1.msra.mxu0 0.0
        %261 = vmatprep.subr.mxu0 0.0
        %262 = vmatpush1.msra.mxu0 0.0
        %263 = vmatprep.subr.mxu0 0.0
        %264 = vmatpush1.msra.mxu0 0.0
        %265 = vmatprep.subr.mxu0 0.0
        %266 = vmatpush1.msra.mxu0 0.0
        %267 = vmatprep.subr.mxu0 0.0
        %268 = vmatpush1.msra.mxu0 0.0
        %269 = vmatprep.subr.mxu0 0.0
        %270 = vmatpush1.msra.mxu0 0.0
        %271 = vmatprep.subr.mxu0 0.0
        %272 = vmatpush1.msra.mxu0 0.0
        %273 = vmatprep.subr.mxu0 0.0
        %274 = vmatpush1.msra.mxu0 0.0
        %275 = vmatprep.subr.mxu0 0.0
        %276 = vmatpush1.msra.mxu0 0.0
        %277 = vmatprep.mubr.f32.mxu0 0.0
        %v278 = vand.u32 %v207, 4294901760
        %v279 = vsub.f32 %v207, %v278
        %v280 = vand.u32 %v279, 4294901760
        %v281 = vsub.f32 %v279, %v280
        %v282 = vand.u32 %v281, 4294901760
        %283 = vmatmul.mubr.f32.gmra.mrb[0].mxu0 %v282
        %v284 = vpop.f32.mrb[0].mxu0
        %v285 = vadd.f32 0.0, %v284
        %v286 = vpop.f32.mrb[0].mxu0
        %287 = vdwg.mxu0
        %288 = vmatprep.subr.mxu0 0.0
        %v289 = vand.u32 %v210, 4294901760
        %v290 = vsub.f32 %v210, %v289
        %v291 = vand.u32 %v290, 4294901760
        %v292 = vsub.f32 %v290, %v291
        %v293 = vand.u32 %v292, 4294901760
        %294 = vmatpush1.msra.mxu0 %v293
        %295 = vmatprep.subr.mxu0 0.0
        %296 = vmatpush1.msra.mxu0 0.0
        %297 = vmatprep.subr.mxu0 0.0
        %298 = vmatpush1.msra.mxu0 0.0
        %299 = vmatprep.subr.mxu0 0.0
        %300 = vmatpush1.msra.mxu0 0.0
        %301 = vmatprep.subr.mxu0 0.0
        %302 = vmatpush1.msra.mxu0 0.0
        %303 = vmatprep.subr.mxu0 0.0
        %304 = vmatpush1.msra.mxu0 0.0
        %305 = vmatprep.subr.mxu0 0.0
        %306 = vmatpush1.msra.mxu0 0.0
        %307 = vmatprep.subr.mxu0 0.0
        %308 = vmatpush1.msra.mxu0 0.0
        %309 = vmatprep.subr.mxu0 0.0
        %310 = vmatpush1.msra.mxu0 0.0
        %311 = vmatprep.subr.mxu0 0.0
        %312 = vmatpush1.msra.mxu0 0.0
        %313 = vmatprep.subr.mxu0 0.0
        %314 = vmatpush1.msra.mxu0 0.0
        %315 = vmatprep.subr.mxu0 0.0
        %316 = vmatpush1.msra.mxu0 0.0
        %317 = vmatprep.subr.mxu0 0.0
        %318 = vmatpush1.msra.mxu0 0.0
        %319 = vmatprep.subr.mxu0 0.0
        %320 = vmatpush1.msra.mxu0 0.0
        %321 = vmatprep.subr.mxu0 0.0
        %322 = vmatpush1.msra.mxu0 0.0
        %323 = vmatprep.subr.mxu0 0.0
        %324 = vmatpush1.msra.mxu0 0.0
        %325 = vmatprep.subr.mxu0 0.0
        %326 = vmatpush1.msra.mxu0 0.0
        %327 = vmatprep.subr.mxu0 0.0
        %328 = vmatpush1.msra.mxu0 0.0
        %329 = vmatprep.subr.mxu0 0.0
        %330 = vmatpush1.msra.mxu0 0.0
        %331 = vmatprep.subr.mxu0 0.0
        %332 = vmatpush1.msra.mxu0 0.0
        %333 = vmatprep.subr.mxu0 0.0
        %334 = vmatpush1.msra.mxu0 0.0
        %335 = vmatprep.subr.mxu0 0.0
        %336 = vmatpush1.msra.mxu0 0.0
        %337 = vmatprep.subr.mxu0 0.0
        %338 = vmatpush1.msra.mxu0 0.0
        %339 = vmatprep.subr.mxu0 0.0
        %340 = vmatpush1.msra.mxu0 0.0
        %341 = vmatprep.subr.mxu0 0.0
        %342 = vmatpush1.msra.mxu0 0.0
        %343 = vmatprep.subr.mxu0 0.0
        %344 = vmatpush1.msra.mxu0 0.0
        %345 = vmatprep.subr.mxu0 0.0
        %346 = vmatpush1.msra.mxu0 0.0
        %347 = vmatprep.subr.mxu0 0.0
        %348 = vmatpush1.msra.mxu0 0.0
        %349 = vmatprep.subr.mxu0 0.0
        %350 = vmatpush1.msra.mxu0 0.0
        %351 = vmatprep.subr.mxu0 0.0
        %352 = vmatpush1.msra.mxu0 0.0
        %353 = vmatprep.subr.mxu0 0.0
        %354 = vmatpush1.msra.mxu0 0.0
        %355 = vmatprep.subr.mxu0 0.0
        %356 = vmatpush1.msra.mxu0 0.0
        %357 = vmatprep.mubr.f32.mxu0 0.0
        %v358 = vand.u32 %v207, 4294901760
        %359 = vmatmul.mubr.f32.gmra.mrb[0].mxu0 %v358
        %v360 = vpop.f32.mrb[0].mxu0
        %v361 = vadd.f32 %v285, %v360
        %v362 = vpop.f32.mrb[0].mxu0
        %363 = vdwg.mxu0
        %364 = vmatprep.subr.mxu0 0.0
        %v365 = vand.u32 %v210, 4294901760
        %v366 = vsub.f32 %v210, %v365
        %367 = vmatpush1.msra.mxu0 %v366
        %368 = vmatprep.subr.mxu0 0.0
        %369 = vmatpush1.msra.mxu0 0.0
        %370 = vmatprep.subr.mxu0 0.0
        %371 = vmatpush1.msra.mxu0 0.0
        %372 = vmatprep.subr.mxu0 0.0
        %373 = vmatpush1.msra.mxu0 0.0
        %374 = vmatprep.subr.mxu0 0.0
        %375 = vmatpush1.msra.mxu0 0.0
        %376 = vmatprep.subr.mxu0 0.0
        %377 = vmatpush1.msra.mxu0 0.0
        %378 = vmatprep.subr.mxu0 0.0
        %379 = vmatpush1.msra.mxu0 0.0
        %380 = vmatprep.subr.mxu0 0.0
        %381 = vmatpush1.msra.mxu0 0.0
        %382 = vmatprep.subr.mxu0 0.0
        %383 = vmatpush1.msra.mxu0 0.0
        %384 = vmatprep.subr.mxu0 0.0
        %385 = vmatpush1.msra.mxu0 0.0
        %386 = vmatprep.subr.mxu0 0.0
        %387 = vmatpush1.msra.mxu0 0.0
        %388 = vmatprep.subr.mxu0 0.0
        %389 = vmatpush1.msra.mxu0 0.0
        %390 = vmatprep.subr.mxu0 0.0
        %391 = vmatpush1.msra.mxu0 0.0
        %392 = vmatprep.subr.mxu0 0.0
        %393 = vmatpush1.msra.mxu0 0.0
        %394 = vmatprep.subr.mxu0 0.0
        %395 = vmatpush1.msra.mxu0 0.0
        %396 = vmatprep.subr.mxu0 0.0
        %397 = vmatpush1.msra.mxu0 0.0
        %398 = vmatprep.subr.mxu0 0.0
        %399 = vmatpush1.msra.mxu0 0.0
        %400 = vmatprep.subr.mxu0 0.0
        %401 = vmatpush1.msra.mxu0 0.0
        %402 = vmatprep.subr.mxu0 0.0
        %403 = vmatpush1.msra.mxu0 0.0
        %404 = vmatprep.subr.mxu0 0.0
        %405 = vmatpush1.msra.mxu0 0.0
        %406 = vmatprep.subr.mxu0 0.0
        %407 = vmatpush1.msra.mxu0 0.0
        %408 = vmatprep.subr.mxu0 0.0
        %409 = vmatpush1.msra.mxu0 0.0
        %410 = vmatprep.subr.mxu0 0.0
        %411 = vmatpush1.msra.mxu0 0.0
        %412 = vmatprep.subr.mxu0 0.0
        %413 = vmatpush1.msra.mxu0 0.0
        %414 = vmatprep.subr.mxu0 0.0
        %415 = vmatpush1.msra.mxu0 0.0
        %416 = vmatprep.subr.mxu0 0.0
        %417 = vmatpush1.msra.mxu0 0.0
        %418 = vmatprep.subr.mxu0 0.0
        %419 = vmatpush1.msra.mxu0 0.0
        %420 = vmatprep.subr.mxu0 0.0
        %421 = vmatpush1.msra.mxu0 0.0
        %422 = vmatprep.subr.mxu0 0.0
        %423 = vmatpush1.msra.mxu0 0.0
        %424 = vmatprep.subr.mxu0 0.0
        %425 = vmatpush1.msra.mxu0 0.0
        %426 = vmatprep.subr.mxu0 0.0
        %427 = vmatpush1.msra.mxu0 0.0
        %428 = vmatprep.subr.mxu0 0.0
        %429 = vmatpush1.msra.mxu0 0.0
        %430 = vmatprep.mubr.f32.mxu0 0.0
        %v431 = vand.u32 %v207, 4294901760
        %v432 = vsub.f32 %v207, %v431
        %433 = vmatmul.mubr.f32.gmra.mrb[0].mxu0 %v432
        %v434 = vpop.f32.mrb[0].mxu0
        %v435 = vadd.f32 %v361, %v434
        %v436 = vpop.f32.mrb[0].mxu0
        %437 = vdwg.mxu0
        %438 = vmatprep.subr.mxu0 0.0
        %v439 = vand.u32 %v210, 4294901760
        %440 = vmatpush1.msra.mxu0 %v439
        %441 = vmatprep.subr.mxu0 0.0
        %442 = vmatpush1.msra.mxu0 0.0
        %443 = vmatprep.subr.mxu0 0.0
        %444 = vmatpush1.msra.mxu0 0.0
        %445 = vmatprep.subr.mxu0 0.0
        %446 = vmatpush1.msra.mxu0 0.0
        %447 = vmatprep.subr.mxu0 0.0
        %448 = vmatpush1.msra.mxu0 0.0
        %449 = vmatprep.subr.mxu0 0.0
        %450 = vmatpush1.msra.mxu0 0.0
        %451 = vmatprep.subr.mxu0 0.0
        %452 = vmatpush1.msra.mxu0 0.0
        %453 = vmatprep.subr.mxu0 0.0
        %454 = vmatpush1.msra.mxu0 0.0
        %455 = vmatprep.subr.mxu0 0.0
        %456 = vmatpush1.msra.mxu0 0.0
        %457 = vmatprep.subr.mxu0 0.0
        %458 = vmatpush1.msra.mxu0 0.0
        %459 = vmatprep.subr.mxu0 0.0
        %460 = vmatpush1.msra.mxu0 0.0
        %461 = vmatprep.subr.mxu0 0.0
        %462 = vmatpush1.msra.mxu0 0.0
        %463 = vmatprep.subr.mxu0 0.0
        %464 = vmatpush1.msra.mxu0 0.0
        %465 = vmatprep.subr.mxu0 0.0
        %466 = vmatpush1.msra.mxu0 0.0
        %467 = vmatprep.subr.mxu0 0.0
        %468 = vmatpush1.msra.mxu0 0.0
        %469 = vmatprep.subr.mxu0 0.0
        %470 = vmatpush1.msra.mxu0 0.0
        %471 = vmatprep.subr.mxu0 0.0
        %472 = vmatpush1.msra.mxu0 0.0
        %473 = vmatprep.subr.mxu0 0.0
        %474 = vmatpush1.msra.mxu0 0.0
        %475 = vmatprep.subr.mxu0 0.0
        %476 = vmatpush1.msra.mxu0 0.0
        %477 = vmatprep.subr.mxu0 0.0
        %478 = vmatpush1.msra.mxu0 0.0
        %479 = vmatprep.subr.mxu0 0.0
        %480 = vmatpush1.msra.mxu0 0.0
        %481 = vmatprep.subr.mxu0 0.0
        %482 = vmatpush1.msra.mxu0 0.0
        %483 = vmatprep.subr.mxu0 0.0
        %484 = vmatpush1.msra.mxu0 0.0
        %485 = vmatprep.subr.mxu0 0.0
        %486 = vmatpush1.msra.mxu0 0.0
        %487 = vmatprep.subr.mxu0 0.0
        %488 = vmatpush1.msra.mxu0 0.0
        %489 = vmatprep.subr.mxu0 0.0
        %490 = vmatpush1.msra.mxu0 0.0
        %491 = vmatprep.subr.mxu0 0.0
        %492 = vmatpush1.msra.mxu0 0.0
        %493 = vmatprep.subr.mxu0 0.0
        %494 = vmatpush1.msra.mxu0 0.0
        %495 = vmatprep.subr.mxu0 0.0
        %496 = vmatpush1.msra.mxu0 0.0
        %497 = vmatprep.subr.mxu0 0.0
        %498 = vmatpush1.msra.mxu0 0.0
        %499 = vmatprep.subr.mxu0 0.0
        %500 = vmatpush1.msra.mxu0 0.0
        %501 = vmatprep.subr.mxu0 0.0
        %502 = vmatpush1.msra.mxu0 0.0
        %503 = vmatprep.mubr.f32.mxu0 0.0
        %v504 = vand.u32 %v207, 4294901760
        %v505 = vsub.f32 %v207, %v504
        %v506 = vand.u32 %v505, 4294901760
        %507 = vmatmul.mubr.f32.gmra.mrb[0].mxu0 %v506
        %v508 = vpop.f32.mrb[0].mxu0
        %v509 = vadd.f32 %v435, %v508
        %v510 = vpop.f32.mrb[0].mxu0
        %511 = vdwg.mxu0
        %512 = vmatprep.subr.mxu0 0.0
        %v513 = vand.u32 %v210, 4294901760
        %v514 = vsub.f32 %v210, %v513
        %v515 = vand.u32 %v514, 4294901760
        %516 = vmatpush1.msra.mxu0 %v515
        %517 = vmatprep.subr.mxu0 0.0
        %518 = vmatpush1.msra.mxu0 0.0
        %519 = vmatprep.subr.mxu0 0.0
        %520 = vmatpush1.msra.mxu0 0.0
        %521 = vmatprep.subr.mxu0 0.0
        %522 = vmatpush1.msra.mxu0 0.0
        %523 = vmatprep.subr.mxu0 0.0
        %524 = vmatpush1.msra.mxu0 0.0
        %525 = vmatprep.subr.mxu0 0.0
        %526 = vmatpush1.msra.mxu0 0.0
        %527 = vmatprep.subr.mxu0 0.0
        %528 = vmatpush1.msra.mxu0 0.0
        %529 = vmatprep.subr.mxu0 0.0
        %530 = vmatpush1.msra.mxu0 0.0
        %531 = vmatprep.subr.mxu0 0.0
        %532 = vmatpush1.msra.mxu0 0.0
        %533 = vmatprep.subr.mxu0 0.0
        %534 = vmatpush1.msra.mxu0 0.0
        %535 = vmatprep.subr.mxu0 0.0
        %536 = vmatpush1.msra.mxu0 0.0
        %537 = vmatprep.subr.mxu0 0.0
        %538 = vmatpush1.msra.mxu0 0.0
        %539 = vmatprep.subr.mxu0 0.0
        %540 = vmatpush1.msra.mxu0 0.0
        %541 = vmatprep.subr.mxu0 0.0
        %542 = vmatpush1.msra.mxu0 0.0
        %543 = vmatprep.subr.mxu0 0.0
        %544 = vmatpush1.msra.mxu0 0.0
        %545 = vmatprep.subr.mxu0 0.0
        %546 = vmatpush1.msra.mxu0 0.0
        %547 = vmatprep.subr.mxu0 0.0
        %548 = vmatpush1.msra.mxu0 0.0
        %549 = vmatprep.subr.mxu0 0.0
        %550 = vmatpush1.msra.mxu0 0.0
        %551 = vmatprep.subr.mxu0 0.0
        %552 = vmatpush1.msra.mxu0 0.0
        %553 = vmatprep.subr.mxu0 0.0
        %554 = vmatpush1.msra.mxu0 0.0
        %555 = vmatprep.subr.mxu0 0.0
        %556 = vmatpush1.msra.mxu0 0.0
        %557 = vmatprep.subr.mxu0 0.0
        %558 = vmatpush1.msra.mxu0 0.0
        %559 = vmatprep.subr.mxu0 0.0
        %560 = vmatpush1.msra.mxu0 0.0
        %561 = vmatprep.subr.mxu0 0.0
        %562 = vmatpush1.msra.mxu0 0.0
        %563 = vmatprep.subr.mxu0 0.0
        %564 = vmatpush1.msra.mxu0 0.0
        %565 = vmatprep.subr.mxu0 0.0
        %566 = vmatpush1.msra.mxu0 0.0
        %567 = vmatprep.subr.mxu0 0.0
        %568 = vmatpush1.msra.mxu0 0.0
        %569 = vmatprep.subr.mxu0 0.0
        %570 = vmatpush1.msra.mxu0 0.0
        %571 = vmatprep.subr.mxu0 0.0
        %572 = vmatpush1.msra.mxu0 0.0
        %573 = vmatprep.subr.mxu0 0.0
        %574 = vmatpush1.msra.mxu0 0.0
        %575 = vmatprep.subr.mxu0 0.0
        %576 = vmatpush1.msra.mxu0 0.0
        %577 = vmatprep.subr.mxu0 0.0
        %578 = vmatpush1.msra.mxu0 0.0
        %579 = vmatprep.mubr.f32.mxu0 0.0
        %v580 = vand.u32 %v207, 4294901760
        %581 = vmatmul.mubr.f32.gmra.mrb[0].mxu0 %v580
        %v582 = vpop.f32.mrb[0].mxu0
        %v583 = vadd.f32 %v509, %v582
        %v584 = vpop.f32.mrb[0].mxu0
        %585 = vdwg.mxu0
        %586 = vmatprep.subr.mxu0 0.0
        %v587 = vand.u32 %v210, 4294901760
        %588 = vmatpush1.msra.mxu0 %v587
        %589 = vmatprep.subr.mxu0 0.0
        %590 = vmatpush1.msra.mxu0 0.0
        %591 = vmatprep.subr.mxu0 0.0
        %592 = vmatpush1.msra.mxu0 0.0
        %593 = vmatprep.subr.mxu0 0.0
        %594 = vmatpush1.msra.mxu0 0.0
        %595 = vmatprep.subr.mxu0 0.0
        %596 = vmatpush1.msra.mxu0 0.0
        %597 = vmatprep.subr.mxu0 0.0
        %598 = vmatpush1.msra.mxu0 0.0
        %599 = vmatprep.subr.mxu0 0.0
        %600 = vmatpush1.msra.mxu0 0.0
        %601 = vmatprep.subr.mxu0 0.0
        %602 = vmatpush1.msra.mxu0 0.0
        %603 = vmatprep.subr.mxu0 0.0
        %604 = vmatpush1.msra.mxu0 0.0
        %605 = vmatprep.subr.mxu0 0.0
        %606 = vmatpush1.msra.mxu0 0.0
        %607 = vmatprep.subr.mxu0 0.0
        %608 = vmatpush1.msra.mxu0 0.0
        %609 = vmatprep.subr.mxu0 0.0
        %610 = vmatpush1.msra.mxu0 0.0
        %611 = vmatprep.subr.mxu0 0.0
        %612 = vmatpush1.msra.mxu0 0.0
        %613 = vmatprep.subr.mxu0 0.0
        %614 = vmatpush1.msra.mxu0 0.0
        %615 = vmatprep.subr.mxu0 0.0
        %616 = vmatpush1.msra.mxu0 0.0
        %617 = vmatprep.subr.mxu0 0.0
        %618 = vmatpush1.msra.mxu0 0.0
        %619 = vmatprep.subr.mxu0 0.0
        %620 = vmatpush1.msra.mxu0 0.0
        %621 = vmatprep.subr.mxu0 0.0
        %622 = vmatpush1.msra.mxu0 0.0
        %623 = vmatprep.subr.mxu0 0.0
        %624 = vmatpush1.msra.mxu0 0.0
        %625 = vmatprep.subr.mxu0 0.0
        %626 = vmatpush1.msra.mxu0 0.0
        %627 = vmatprep.subr.mxu0 0.0
        %628 = vmatpush1.msra.mxu0 0.0
        %629 = vmatprep.subr.mxu0 0.0
        %630 = vmatpush1.msra.mxu0 0.0
        %631 = vmatprep.subr.mxu0 0.0
        %632 = vmatpush1.msra.mxu0 0.0
        %633 = vmatprep.subr.mxu0 0.0
        %634 = vmatpush1.msra.mxu0 0.0
        %635 = vmatprep.subr.mxu0 0.0
        %636 = vmatpush1.msra.mxu0 0.0
        %637 = vmatprep.subr.mxu0 0.0
        %638 = vmatpush1.msra.mxu0 0.0
        %639 = vmatprep.subr.mxu0 0.0
        %640 = vmatpush1.msra.mxu0 0.0
        %641 = vmatprep.subr.mxu0 0.0
        %642 = vmatpush1.msra.mxu0 0.0
        %643 = vmatprep.subr.mxu0 0.0
        %644 = vmatpush1.msra.mxu0 0.0
        %645 = vmatprep.subr.mxu0 0.0
        %646 = vmatpush1.msra.mxu0 0.0
        %647 = vmatprep.subr.mxu0 0.0
        %648 = vmatpush1.msra.mxu0 0.0
        %649 = vmatprep.subr.mxu0 0.0
        %650 = vmatpush1.msra.mxu0 0.0
        %651 = vmatprep.mubr.f32.mxu0 0.0
        %v652 = vand.u32 %v207, 4294901760
        %653 = vmatmul.mubr.f32.gmra.mrb[0].mxu0 %v652
        %v654 = vpop.f32.mrb[0].mxu0
        %v655 = vadd.f32 %v583, %v654
        %v656 = vpop.f32.mrb[0].mxu0
        %657 = vdwg.mxu0
        %v658 = vmax.f32 %v655, 0.0
        %v659 = vld [vmem:[%s2] sm:$0x3]
        %vm660 = vcmask 15360
        %v662 = vsel %vm660, %v658, 0
        %vm664 = vcmask 1041408
        %v666 = vsel %vm664, %v659, 0
        %668 = vmatprep.subr.mxu0 0.0
        %v669 = vand.u32 %v666, 4294901760
        %670 = vmatpush1.msra.mxu0 %v669
        %671 = vmatprep.subr.mxu0 0.0
        %672 = vmatpush1.msra.mxu0 0.0
        %673 = vmatprep.subr.mxu0 0.0
        %674 = vmatpush1.msra.mxu0 0.0
        %675 = vmatprep.subr.mxu0 0.0
        %676 = vmatpush1.msra.mxu0 0.0
        %677 = vmatprep.subr.mxu0 0.0
        %678 = vmatpush1.msra.mxu0 0.0
        %679 = vmatprep.subr.mxu0 0.0
        %680 = vmatpush1.msra.mxu0 0.0
        %681 = vmatprep.subr.mxu0 0.0
        %682 = vmatpush1.msra.mxu0 0.0
        %683 = vmatprep.subr.mxu0 0.0
        %684 = vmatpush1.msra.mxu0 0.0
        %685 = vmatprep.subr.mxu0 0.0
        %686 = vmatpush1.msra.mxu0 0.0
        %687 = vmatprep.subr.mxu0 0.0
        %688 = vmatpush1.msra.mxu0 0.0
        %689 = vmatprep.subr.mxu0 0.0
        %690 = vmatpush1.msra.mxu0 0.0
        %691 = vmatprep.subr.mxu0 0.0
        %692 = vmatpush1.msra.mxu0 0.0
        %693 = vmatprep.subr.mxu0 0.0
        %694 = vmatpush1.msra.mxu0 0.0
        %695 = vmatprep.subr.mxu0 0.0
        %696 = vmatpush1.msra.mxu0 0.0
        %697 = vmatprep.subr.mxu0 0.0
        %698 = vmatpush1.msra.mxu0 0.0
        %699 = vmatprep.subr.mxu0 0.0
        %700 = vmatpush1.msra.mxu0 0.0
        %701 = vmatprep.subr.mxu0 0.0
        %702 = vmatpush1.msra.mxu0 0.0
        %703 = vmatprep.subr.mxu0 0.0
        %704 = vmatpush1.msra.mxu0 0.0
        %705 = vmatprep.subr.mxu0 0.0
        %706 = vmatpush1.msra.mxu0 0.0
        %707 = vmatprep.subr.mxu0 0.0
        %708 = vmatpush1.msra.mxu0 0.0
        %709 = vmatprep.subr.mxu0 0.0
        %710 = vmatpush1.msra.mxu0 0.0
        %711 = vmatprep.subr.mxu0 0.0
        %712 = vmatpush1.msra.mxu0 0.0
        %713 = vmatprep.subr.mxu0 0.0
        %714 = vmatpush1.msra.mxu0 0.0
        %715 = vmatprep.subr.mxu0 0.0
        %716 = vmatpush1.msra.mxu0 0.0
        %717 = vmatprep.subr.mxu0 0.0
        %718 = vmatpush1.msra.mxu0 0.0
        %719 = vmatprep.subr.mxu0 0.0
        %720 = vmatpush1.msra.mxu0 0.0
        %721 = vmatprep.subr.mxu0 0.0
        %722 = vmatpush1.msra.mxu0 0.0
        %723 = vmatprep.subr.mxu0 0.0
        %724 = vmatpush1.msra.mxu0 0.0
        %725 = vmatprep.subr.mxu0 0.0
        %726 = vmatpush1.msra.mxu0 0.0
        %727 = vmatprep.subr.mxu0 0.0
        %728 = vmatpush1.msra.mxu0 0.0
        %729 = vmatprep.subr.mxu0 0.0
        %730 = vmatpush1.msra.mxu0 0.0
        %731 = vmatprep.subr.mxu0 0.0
        %732 = vmatpush1.msra.mxu0 0.0
        %733 = vmatprep.mubr.f32.mxu0 0.0
        %v734 = vand.u32 %v662, 4294901760
        %v735 = vsub.f32 %v662, %v734
        %v736 = vand.u32 %v735, 4294901760
        %v737 = vsub.f32 %v735, %v736
        %v738 = vand.u32 %v737, 4294901760
        %739 = vmatmul.mubr.f32.gmra.mrb[0].mxu0 %v738
        %v740 = vpop.f32.mrb[0].mxu0
        %v741 = vadd.f32 0.0, %v740
        %v742 = vpop.f32.mrb[0].mxu0
        %743 = vdwg.mxu0
        %744 = vmatprep.subr.mxu0 0.0
        %v745 = vand.u32 %v666, 4294901760
        %v746 = vsub.f32 %v666, %v745
        %v747 = vand.u32 %v746, 4294901760
        %v748 = vsub.f32 %v746, %v747
        %v749 = vand.u32 %v748, 4294901760
        %750 = vmatpush1.msra.mxu0 %v749
        %751 = vmatprep.subr.mxu0 0.0
        %752 = vmatpush1.msra.mxu0 0.0
        %753 = vmatprep.subr.mxu0 0.0
        %754 = vmatpush1.msra.mxu0 0.0
        %755 = vmatprep.subr.mxu0 0.0
        %756 = vmatpush1.msra.mxu0 0.0
        %757 = vmatprep.subr.mxu0 0.0
        %758 = vmatpush1.msra.mxu0 0.0
        %759 = vmatprep.subr.mxu0 0.0
        %760 = vmatpush1.msra.mxu0 0.0
        %761 = vmatprep.subr.mxu0 0.0
        %762 = vmatpush1.msra.mxu0 0.0
        %763 = vmatprep.subr.mxu0 0.0
        %764 = vmatpush1.msra.mxu0 0.0
        %765 = vmatprep.subr.mxu0 0.0
        %766 = vmatpush1.msra.mxu0 0.0
        %767 = vmatprep.subr.mxu0 0.0
        %768 = vmatpush1.msra.mxu0 0.0
        %769 = vmatprep.subr.mxu0 0.0
        %770 = vmatpush1.msra.mxu0 0.0
        %771 = vmatprep.subr.mxu0 0.0
        %772 = vmatpush1.msra.mxu0 0.0
        %773 = vmatprep.subr.mxu0 0.0
        %774 = vmatpush1.msra.mxu0 0.0
        %775 = vmatprep.subr.mxu0 0.0
        %776 = vmatpush1.msra.mxu0 0.0
        %777 = vmatprep.subr.mxu0 0.0
        %778 = vmatpush1.msra.mxu0 0.0
        %779 = vmatprep.subr.mxu0 0.0
        %780 = vmatpush1.msra.mxu0 0.0
        %781 = vmatprep.subr.mxu0 0.0
        %782 = vmatpush1.msra.mxu0 0.0
        %783 = vmatprep.subr.mxu0 0.0
        %784 = vmatpush1.msra.mxu0 0.0
        %785 = vmatprep.subr.mxu0 0.0
        %786 = vmatpush1.msra.mxu0 0.0
        %787 = vmatprep.subr.mxu0 0.0
        %788 = vmatpush1.msra.mxu0 0.0
        %789 = vmatprep.subr.mxu0 0.0
        %790 = vmatpush1.msra.mxu0 0.0
        %791 = vmatprep.subr.mxu0 0.0
        %792 = vmatpush1.msra.mxu0 0.0
        %793 = vmatprep.subr.mxu0 0.0
        %794 = vmatpush1.msra.mxu0 0.0
        %795 = vmatprep.subr.mxu0 0.0
        %796 = vmatpush1.msra.mxu0 0.0
        %797 = vmatprep.subr.mxu0 0.0
        %798 = vmatpush1.msra.mxu0 0.0
        %799 = vmatprep.subr.mxu0 0.0
        %800 = vmatpush1.msra.mxu0 0.0
        %801 = vmatprep.subr.mxu0 0.0
        %802 = vmatpush1.msra.mxu0 0.0
        %803 = vmatprep.subr.mxu0 0.0
        %804 = vmatpush1.msra.mxu0 0.0
        %805 = vmatprep.subr.mxu0 0.0
        %806 = vmatpush1.msra.mxu0 0.0
        %807 = vmatprep.subr.mxu0 0.0
        %808 = vmatpush1.msra.mxu0 0.0
        %809 = vmatprep.subr.mxu0 0.0
        %810 = vmatpush1.msra.mxu0 0.0
        %811 = vmatprep.subr.mxu0 0.0
        %812 = vmatpush1.msra.mxu0 0.0
        %813 = vmatprep.mubr.f32.mxu0 0.0
        %v814 = vand.u32 %v662, 4294901760
        %815 = vmatmul.mubr.f32.gmra.mrb[0].mxu0 %v814
        %v816 = vpop.f32.mrb[0].mxu0
        %v817 = vadd.f32 %v741, %v816
        %v818 = vpop.f32.mrb[0].mxu0
        %819 = vdwg.mxu0
        %820 = vmatprep.subr.mxu0 0.0
        %v821 = vand.u32 %v666, 4294901760
        %v822 = vsub.f32 %v666, %v821
        %823 = vmatpush1.msra.mxu0 %v822
        %824 = vmatprep.subr.mxu0 0.0
        %825 = vmatpush1.msra.mxu0 0.0
        %826 = vmatprep.subr.mxu0 0.0
        %827 = vmatpush1.msra.mxu0 0.0
        %828 = vmatprep.subr.mxu0 0.0
        %829 = vmatpush1.msra.mxu0 0.0
        %830 = vmatprep.subr.mxu0 0.0
        %831 = vmatpush1.msra.mxu0 0.0
        %832 = vmatprep.subr.mxu0 0.0
        %833 = vmatpush1.msra.mxu0 0.0
        %834 = vmatprep.subr.mxu0 0.0
        %835 = vmatpush1.msra.mxu0 0.0
        %836 = vmatprep.subr.mxu0 0.0
        %837 = vmatpush1.msra.mxu0 0.0
        %838 = vmatprep.subr.mxu0 0.0
        %839 = vmatpush1.msra.mxu0 0.0
        %840 = vmatprep.subr.mxu0 0.0
        %841 = vmatpush1.msra.mxu0 0.0
        %842 = vmatprep.subr.mxu0 0.0
        %843 = vmatpush1.msra.mxu0 0.0
        %844 = vmatprep.subr.mxu0 0.0
        %845 = vmatpush1.msra.mxu0 0.0
        %846 = vmatprep.subr.mxu0 0.0
        %847 = vmatpush1.msra.mxu0 0.0
        %848 = vmatprep.subr.mxu0 0.0
        %849 = vmatpush1.msra.mxu0 0.0
        %850 = vmatprep.subr.mxu0 0.0
        %851 = vmatpush1.msra.mxu0 0.0
        %852 = vmatprep.subr.mxu0 0.0
        %853 = vmatpush1.msra.mxu0 0.0
        %854 = vmatprep.subr.mxu0 0.0
        %855 = vmatpush1.msra.mxu0 0.0
        %856 = vmatprep.subr.mxu0 0.0
        %857 = vmatpush1.msra.mxu0 0.0
        %858 = vmatprep.subr.mxu0 0.0
        %859 = vmatpush1.msra.mxu0 0.0
        %860 = vmatprep.subr.mxu0 0.0
        %861 = vmatpush1.msra.mxu0 0.0
        %862 = vmatprep.subr.mxu0 0.0
        %863 = vmatpush1.msra.mxu0 0.0
        %864 = vmatprep.subr.mxu0 0.0
        %865 = vmatpush1.msra.mxu0 0.0
        %866 = vmatprep.subr.mxu0 0.0
        %867 = vmatpush1.msra.mxu0 0.0
        %868 = vmatprep.subr.mxu0 0.0
        %869 = vmatpush1.msra.mxu0 0.0
        %870 = vmatprep.subr.mxu0 0.0
        %871 = vmatpush1.msra.mxu0 0.0
        %872 = vmatprep.subr.mxu0 0.0
        %873 = vmatpush1.msra.mxu0 0.0
        %874 = vmatprep.subr.mxu0 0.0
        %875 = vmatpush1.msra.mxu0 0.0
        %876 = vmatprep.subr.mxu0 0.0
        %877 = vmatpush1.msra.mxu0 0.0
        %878 = vmatprep.subr.mxu0 0.0
        %879 = vmatpush1.msra.mxu0 0.0
        %880 = vmatprep.subr.mxu0 0.0
        %881 = vmatpush1.msra.mxu0 0.0
        %882 = vmatprep.subr.mxu0 0.0
        %883 = vmatpush1.msra.mxu0 0.0
        %884 = vmatprep.subr.mxu0 0.0
        %885 = vmatpush1.msra.mxu0 0.0
        %886 = vmatprep.mubr.f32.mxu0 0.0
        %v887 = vand.u32 %v662, 4294901760
        %v888 = vsub.f32 %v662, %v887
        %889 = vmatmul.mubr.f32.gmra.mrb[0].mxu0 %v888
        %v890 = vpop.f32.mrb[0].mxu0
        %v891 = vadd.f32 %v817, %v890
        %v892 = vpop.f32.mrb[0].mxu0
        %893 = vdwg.mxu0
        %894 = vmatprep.subr.mxu0 0.0
        %v895 = vand.u32 %v666, 4294901760
        %896 = vmatpush1.msra.mxu0 %v895
        %897 = vmatprep.subr.mxu0 0.0
        %898 = vmatpush1.msra.mxu0 0.0
        %899 = vmatprep.subr.mxu0 0.0
        %900 = vmatpush1.msra.mxu0 0.0
        %901 = vmatprep.subr.mxu0 0.0
        %902 = vmatpush1.msra.mxu0 0.0
        %903 = vmatprep.subr.mxu0 0.0
        %904 = vmatpush1.msra.mxu0 0.0
        %905 = vmatprep.subr.mxu0 0.0
        %906 = vmatpush1.msra.mxu0 0.0
        %907 = vmatprep.subr.mxu0 0.0
        %908 = vmatpush1.msra.mxu0 0.0
        %909 = vmatprep.subr.mxu0 0.0
        %910 = vmatpush1.msra.mxu0 0.0
        %911 = vmatprep.subr.mxu0 0.0
        %912 = vmatpush1.msra.mxu0 0.0
        %913 = vmatprep.subr.mxu0 0.0
        %914 = vmatpush1.msra.mxu0 0.0
        %915 = vmatprep.subr.mxu0 0.0
        %916 = vmatpush1.msra.mxu0 0.0
        %917 = vmatprep.subr.mxu0 0.0
        %918 = vmatpush1.msra.mxu0 0.0
        %919 = vmatprep.subr.mxu0 0.0
        %920 = vmatpush1.msra.mxu0 0.0
        %921 = vmatprep.subr.mxu0 0.0
        %922 = vmatpush1.msra.mxu0 0.0
        %923 = vmatprep.subr.mxu0 0.0
        %924 = vmatpush1.msra.mxu0 0.0
        %925 = vmatprep.subr.mxu0 0.0
        %926 = vmatpush1.msra.mxu0 0.0
        %927 = vmatprep.subr.mxu0 0.0
        %928 = vmatpush1.msra.mxu0 0.0
        %929 = vmatprep.subr.mxu0 0.0
        %930 = vmatpush1.msra.mxu0 0.0
        %931 = vmatprep.subr.mxu0 0.0
        %932 = vmatpush1.msra.mxu0 0.0
        %933 = vmatprep.subr.mxu0 0.0
        %934 = vmatpush1.msra.mxu0 0.0
        %935 = vmatprep.subr.mxu0 0.0
        %936 = vmatpush1.msra.mxu0 0.0
        %937 = vmatprep.subr.mxu0 0.0
        %938 = vmatpush1.msra.mxu0 0.0
        %939 = vmatprep.subr.mxu0 0.0
        %940 = vmatpush1.msra.mxu0 0.0
        %941 = vmatprep.subr.mxu0 0.0
        %942 = vmatpush1.msra.mxu0 0.0
        %943 = vmatprep.subr.mxu0 0.0
        %944 = vmatpush1.msra.mxu0 0.0
        %945 = vmatprep.subr.mxu0 0.0
        %946 = vmatpush1.msra.mxu0 0.0
        %947 = vmatprep.subr.mxu0 0.0
        %948 = vmatpush1.msra.mxu0 0.0
        %949 = vmatprep.subr.mxu0 0.0
        %950 = vmatpush1.msra.mxu0 0.0
        %951 = vmatprep.subr.mxu0 0.0
        %952 = vmatpush1.msra.mxu0 0.0
        %953 = vmatprep.subr.mxu0 0.0
        %954 = vmatpush1.msra.mxu0 0.0
        %955 = vmatprep.subr.mxu0 0.0
        %956 = vmatpush1.msra.mxu0 0.0
        %957 = vmatprep.subr.mxu0 0.0
        %958 = vmatpush1.msra.mxu0 0.0
        %959 = vmatprep.mubr.f32.mxu0 0.0
        %v960 = vand.u32 %v662, 4294901760
        %v961 = vsub.f32 %v662, %v960
        %v962 = vand.u32 %v961, 4294901760
        %963 = vmatmul.mubr.f32.gmra.mrb[0].mxu0 %v962
        %v964 = vpop.f32.mrb[0].mxu0
        %v965 = vadd.f32 %v891, %v964
        %v966 = vpop.f32.mrb[0].mxu0
        %967 = vdwg.mxu0
        %968 = vmatprep.subr.mxu0 0.0
        %v969 = vand.u32 %v666, 4294901760
        %v970 = vsub.f32 %v666, %v969
        %v971 = vand.u32 %v970, 4294901760
        %972 = vmatpush1.msra.mxu0 %v971
        %973 = vmatprep.subr.mxu0 0.0
        %974 = vmatpush1.msra.mxu0 0.0
        %975 = vmatprep.subr.mxu0 0.0
        %976 = vmatpush1.msra.mxu0 0.0
        %977 = vmatprep.subr.mxu0 0.0
        %978 = vmatpush1.msra.mxu0 0.0
        %979 = vmatprep.subr.mxu0 0.0
        %980 = vmatpush1.msra.mxu0 0.0
        %981 = vmatprep.subr.mxu0 0.0
        %982 = vmatpush1.msra.mxu0 0.0
        %983 = vmatprep.subr.mxu0 0.0
        %984 = vmatpush1.msra.mxu0 0.0
        %985 = vmatprep.subr.mxu0 0.0
        %986 = vmatpush1.msra.mxu0 0.0
        %987 = vmatprep.subr.mxu0 0.0
        %988 = vmatpush1.msra.mxu0 0.0
        %989 = vmatprep.subr.mxu0 0.0
        %990 = vmatpush1.msra.mxu0 0.0
        %991 = vmatprep.subr.mxu0 0.0
        %992 = vmatpush1.msra.mxu0 0.0
        %993 = vmatprep.subr.mxu0 0.0
        %994 = vmatpush1.msra.mxu0 0.0
        %995 = vmatprep.subr.mxu0 0.0
        %996 = vmatpush1.msra.mxu0 0.0
        %997 = vmatprep.subr.mxu0 0.0
        %998 = vmatpush1.msra.mxu0 0.0
        %999 = vmatprep.subr.mxu0 0.0
        %1000 = vmatpush1.msra.mxu0 0.0
        %1001 = vmatprep.subr.mxu0 0.0
        %1002 = vmatpush1.msra.mxu0 0.0
        %1003 = vmatprep.subr.mxu0 0.0
        %1004 = vmatpush1.msra.mxu0 0.0
        %1005 = vmatprep.subr.mxu0 0.0
        %1006 = vmatpush1.msra.mxu0 0.0
        %1007 = vmatprep.subr.mxu0 0.0
        %1008 = vmatpush1.msra.mxu0 0.0
        %1009 = vmatprep.subr.mxu0 0.0
        %1010 = vmatpush1.msra.mxu0 0.0
        %1011 = vmatprep.subr.mxu0 0.0
        %1012 = vmatpush1.msra.mxu0 0.0
        %1013 = vmatprep.subr.mxu0 0.0
        %1014 = vmatpush1.msra.mxu0 0.0
        %1015 = vmatprep.subr.mxu0 0.0
        %1016 = vmatpush1.msra.mxu0 0.0
        %1017 = vmatprep.subr.mxu0 0.0
        %1018 = vmatpush1.msra.mxu0 0.0
        %1019 = vmatprep.subr.mxu0 0.0
        %1020 = vmatpush1.msra.mxu0 0.0
        %1021 = vmatprep.subr.mxu0 0.0
        %1022 = vmatpush1.msra.mxu0 0.0
        %1023 = vmatprep.subr.mxu0 0.0
        %1024 = vmatpush1.msra.mxu0 0.0
        %1025 = vmatprep.subr.mxu0 0.0
        %1026 = vmatpush1.msra.mxu0 0.0
        %1027 = vmatprep.subr.mxu0 0.0
        %1028 = vmatpush1.msra.mxu0 0.0
        %1029 = vmatprep.subr.mxu0 0.0
        %1030 = vmatpush1.msra.mxu0 0.0
        %1031 = vmatprep.subr.mxu0 0.0
        %1032 = vmatpush1.msra.mxu0 0.0
        %1033 = vmatprep.subr.mxu0 0.0
        %1034 = vmatpush1.msra.mxu0 0.0
        %1035 = vmatprep.mubr.f32.mxu0 0.0
        %v1036 = vand.u32 %v662, 4294901760
        %1037 = vmatmul.mubr.f32.gmra.mrb[0].mxu0 %v1036
        %v1038 = vpop.f32.mrb[0].mxu0
        %v1039 = vadd.f32 %v965, %v1038
        %v1040 = vpop.f32.mrb[0].mxu0
        %1041 = vdwg.mxu0
        %1042 = vmatprep.subr.mxu0 0.0
        %v1043 = vand.u32 %v666, 4294901760
        %1044 = vmatpush1.msra.mxu0 %v1043
        %1045 = vmatprep.subr.mxu0 0.0
        %1046 = vmatpush1.msra.mxu0 0.0
        %1047 = vmatprep.subr.mxu0 0.0
        %1048 = vmatpush1.msra.mxu0 0.0
        %1049 = vmatprep.subr.mxu0 0.0
        %1050 = vmatpush1.msra.mxu0 0.0
        %1051 = vmatprep.subr.mxu0 0.0
        %1052 = vmatpush1.msra.mxu0 0.0
        %1053 = vmatprep.subr.mxu0 0.0
        %1054 = vmatpush1.msra.mxu0 0.0
        %1055 = vmatprep.subr.mxu0 0.0
        %1056 = vmatpush1.msra.mxu0 0.0
        %1057 = vmatprep.subr.mxu0 0.0
        %1058 = vmatpush1.msra.mxu0 0.0
        %1059 = vmatprep.subr.mxu0 0.0
        %1060 = vmatpush1.msra.mxu0 0.0
        %1061 = vmatprep.subr.mxu0 0.0
        %1062 = vmatpush1.msra.mxu0 0.0
        %1063 = vmatprep.subr.mxu0 0.0
        %1064 = vmatpush1.msra.mxu0 0.0
        %1065 = vmatprep.subr.mxu0 0.0
        %1066 = vmatpush1.msra.mxu0 0.0
        %1067 = vmatprep.subr.mxu0 0.0
        %1068 = vmatpush1.msra.mxu0 0.0
        %1069 = vmatprep.subr.mxu0 0.0
        %1070 = vmatpush1.msra.mxu0 0.0
        %1071 = vmatprep.subr.mxu0 0.0
        %1072 = vmatpush1.msra.mxu0 0.0
        %1073 = vmatprep.subr.mxu0 0.0
        %1074 = vmatpush1.msra.mxu0 0.0
        %1075 = vmatprep.subr.mxu0 0.0
        %1076 = vmatpush1.msra.mxu0 0.0
        %1077 = vmatprep.subr.mxu0 0.0
        %1078 = vmatpush1.msra.mxu0 0.0
        %1079 = vmatprep.subr.mxu0 0.0
        %1080 = vmatpush1.msra.mxu0 0.0
        %1081 = vmatprep.subr.mxu0 0.0
        %1082 = vmatpush1.msra.mxu0 0.0
        %1083 = vmatprep.subr.mxu0 0.0
        %1084 = vmatpush1.msra.mxu0 0.0
        %1085 = vmatprep.subr.mxu0 0.0
        %1086 = vmatpush1.msra.mxu0 0.0
        %1087 = vmatprep.subr.mxu0 0.0
        %1088 = vmatpush1.msra.mxu0 0.0
        %1089 = vmatprep.subr.mxu0 0.0
        %1090 = vmatpush1.msra.mxu0 0.0
        %1091 = vmatprep.subr.mxu0 0.0
        %1092 = vmatpush1.msra.mxu0 0.0
        %1093 = vmatprep.subr.mxu0 0.0
        %1094 = vmatpush1.msra.mxu0 0.0
        %1095 = vmatprep.subr.mxu0 0.0
        %1096 = vmatpush1.msra.mxu0 0.0
        %1097 = vmatprep.subr.mxu0 0.0
        %1098 = vmatpush1.msra.mxu0 0.0
        %1099 = vmatprep.subr.mxu0 0.0
        %1100 = vmatpush1.msra.mxu0 0.0
        %1101 = vmatprep.subr.mxu0 0.0
        %1102 = vmatpush1.msra.mxu0 0.0
        %1103 = vmatprep.subr.mxu0 0.0
        %1104 = vmatpush1.msra.mxu0 0.0
        %1105 = vmatprep.subr.mxu0 0.0
        %1106 = vmatpush1.msra.mxu0 0.0
        %1107 = vmatprep.mubr.f32.mxu0 0.0
        %v1108 = vand.u32 %v662, 4294901760
        %1109 = vmatmul.mubr.f32.gmra.mrb[0].mxu0 %v1108
        %v1110 = vpop.f32.mrb[0].mxu0
        %v1111 = vadd.f32 %v1039, %v1110
        %v1112 = vpop.f32.mrb[0].mxu0
        %1113 = vdwg.mxu0
        %v1114 = vxor.u32 %v1111, 2147483648
        %v1115 = vmul.f32 %v1114, 1.442695
        %v1116 = vpow.pop %v1115
        %v1117 = vadd.f32 %v1116, 1.0
        %v1118 = vrcp.pop %v1117
        %v1119 = vmul.f32 1.0, %v1118
        %v1120 = vadd.f32 %v1119, 1.0
        %v1121 = vlaneseq
        %v1122 = vshrl.u32 %v1121, 7
        %v1123 = vsub.s32 0, %v1122
        %v1124 = vrot.slane %v1120, %v1123
        %1126 = vbcast.lane.b32.xlu0 %v1124, 256
        %v1127 = vpop.permute.xlu0 %1126
        %v1130 = vunpack.c.l.s4 839922192
        %v1131 = vunpack.c.0.s8 %v1130
        %v1132 = vlaneseq
        %v1133 = vshrl.u32 %v1132, 7
        %v1134 = vsub.s32 %v1131, %v1133
        %v1135 = vrot.slane %v1127, %v1134
        %v1137 = vmul.f32 %v187, %v1135
        %1138 = vst [vmem:[%s186] sm:$0xff] %v1137
        %s1139 = sand.u32 %s96, 1
        %s1140 = scalar_lea.sflag [#allocation4], %s1139
        %s1141 = sand.u32 %s96, 1
        %s1142 = smul.addr %s1141, 8
        %s1143 = scalar_lea.vmem [#allocation5], %s1142
        // Predicated region
        $region37: #{tpu_custom_call.1} parent=31 // pred_check
          %p1144 = pneg %p106
        $region38: #{tpu_custom_call.1} parent=31 // pred_check_branch
          %1146 = sbr.rel (%p1144) target = $region40
        $region39: #{tpu_custom_call.1} parent=31 // pred_region
          %s1148 = ssub.s32 128, 128
          %1149 = vsyncadd %s1140, %s1148
          %s1150 = smul.addr %s20, 2
          %s1151 = smul.addr %s1150, 64
          %s1152 = scalar_lea.hbm %s3, %s1151
          %s1154 = sshll.u32 %s1143, 4
          %s1155 = int_to_ptr.vmem [resolvable:$true] %s1154
          %1157 = dma.vmem_to_hbm [thread:$0]  %s1155, 128, %s1152, %s1140
        $region40: #{tpu_custom_call.1} parent=31 // pred_fallthru
          _
      $region32: #{tpu_custom_call.1} parent=5 // pred_fallthru
        _
      %p1158 = scmp.le.s32.totalorder 2, %s15
      // Predicated region
      $region41: #{tpu_custom_call.1} parent=5 // pred_check
        %p1159 = pneg %p1158
      $region42: #{tpu_custom_call.1} parent=5 // pred_check_branch
        %1161 = sbr.rel (%p1159) target = $region44
      $region43: #{tpu_custom_call.1} parent=5 // pred_region
        %s1162 = ssub.s32 %s15, 2
        // Predicated region
        $region45: #{tpu_custom_call.1} parent=43 // pred_check
          %p1163 = pneg %p112
        $region46: #{tpu_custom_call.1} parent=43 // pred_check_branch
          %1165 = sbr.rel (%p1163) target = $region48
        $region47: #{tpu_custom_call.1} parent=43 // pred_region
          %s1166 = sand.u32 %s97, 1
          %s1167 = scalar_lea.sflag [#allocation4], %s1166
          %s1168 = sand.u32 %s97, 1
          %s1169 = smul.addr %s1168, 8
          %s1170 = scalar_lea.vmem [#allocation5], %s1169
          %1171 = dma.done %s1167, 128
        $region48: #{tpu_custom_call.1} parent=43 // pred_fallthru
          _
      $region44: #{tpu_custom_call.1} parent=5 // pred_fallthru
        _
    $region6: #{tpu_custom_call.1} parent=1 // loop_footer
      %s19 = sadd.s32 1, %s15
    $region7: #{tpu_custom_call.1} parent=1 // loop_footer_branch
      %14 = sbr.rel target = $region3
    $region8: #{tpu_custom_call.1} parent=1 // loop_exit
      _
    %1172 = vsyncpa [#allocation3], 1
    %s1173 = scalar_lea.sflag [#allocation3], 1
    %1174 = vsyncpa %s1173, 1
    %1175 = vsyncpa [#allocation4], 1
    %s1176 = scalar_lea.sflag [#allocation4], 1
    %1177 = vsyncpa %s1176, 1

</llo_original>
